<compile_context>
chip_gen: v7x
topology: tpu7x:2x2x1
jax: 0.10.0
libtpu: 0.0.40
codegen_flags: <defaults>
</compile_context>

<pallas_src>
import math

import jax
import jax.numpy as jnp
from jax.experimental import pallas as pl
from jax.experimental.pallas import tpu as pltpu

# ~4 MiB per block: with double-buffered in + out specs the VMEM footprint is
# <= ~16 MiB, which fits v5e's default scoped limit and leaves lots of
# headroom on v6e (128 MiB) / v7x (64 MiB physical, 32 MiB scoped default).
_TARGET_TILE_BYTES = 4 * 1024 * 1024
_VMEM_LIMIT_BYTES = 32 * 1024 * 1024


def _identity_kernel(x_ref, o_ref):
    # Pure pass-through: copy the current VMEM tile to the output tile.
    o_ref[...] = x_ref[...]


def _sublane_multiple(dtype) -> int:
    """Minimum second-to-last tile dim by element width (f32:8, bf16:16, i8:32)."""
    itemsize = jnp.dtype(dtype).itemsize
    return {4: 8, 2: 16, 1: 32}.get(itemsize, 8)


def _lane_dense_view(shape, dtype):
    """Pick (rows, cols) with cols % 128 == 0 straight from `shape`.

    Candidate column widths are suffix products of the original shape, so the
    reshape is a free view (no padding, no extra HBM pass).  Returns None when
    no aligned factorization exists (caller falls back to a padded path).
    """
    if len(shape) == 0:
        return None
    itemsize = jnp.dtype(dtype).itemsize
    sublane = _sublane_multiple(dtype)
    total = int(math.prod(shape))
    if total == 0:
        return None
    suffix, candidates = 1, []
    for d in reversed(shape):
        suffix *= d
        candidates.append(suffix)
    # Prefer the widest lane-dense view whose minimal (sublane-tall) tile still
    # fits the per-block VMEM budget.
    for cols in sorted(set(candidates), reverse=True):
        if cols % 128 == 0 and cols * sublane * itemsize <= _TARGET_TILE_BYTES:
            return total // cols, cols
    return None


def _tiled_identity_2d(x2d: jax.Array, *, alias: bool) -> jax.Array:
    """Identity copy of a 2D lane-dense slab through a Pallas kernel."""
    rows, cols = x2d.shape
    dtype = x2d.dtype
    itemsize = jnp.dtype(dtype).itemsize
    sublane = _sublane_multiple(dtype)
    row_bytes = cols * itemsize
    alias_kwargs = {"input_output_aliases": {0: 0}} if alias else {}

    if rows * row_bytes <= _TARGET_TILE_BYTES:
        # Tiny input: single-shot gridless call (whole array is one block),
        # no pipeline setup overhead.
        return pl.pallas_call(
            _identity_kernel,
            out_shape=jax.ShapeDtypeStruct((rows, cols), dtype),
            compiler_params=pltpu.CompilerParams(
                vmem_limit_bytes=_VMEM_LIMIT_BYTES,
            ),
            **alias_kwargs,
        )(x2d)

    # Large input: tile the row dimension with big, lane-dense blocks.
    target_rows = max(_TARGET_TILE_BYTES // row_bytes, 1)
    tile_rows = min(rows, target_rows)
    tile_rows = max((tile_rows // sublane) * sublane, sublane)
    grid = (pl.cdiv(rows, tile_rows),)  # Pallas masks the trailing partial block.

    return pl.pallas_call(
        _identity_kernel,
        out_shape=jax.ShapeDtypeStruct((rows, cols), dtype),
        grid=grid,
        in_specs=[pl.BlockSpec((tile_rows, cols), lambda i: (i, 0))],
        out_specs=pl.BlockSpec((tile_rows, cols), lambda i: (i, 0)),
        compiler_params=pltpu.CompilerParams(
            dimension_semantics=("parallel",),
            vmem_limit_bytes=_VMEM_LIMIT_BYTES,
        ),
        **alias_kwargs,
    )(x2d)


def basic_module_forward(x: jax.Array) -> jax.Array:
    """Pallas "forward" for BasicModule (identity pass-through).

    The PyTorch forward is a no-op stub; the honest equivalent would be to
    return `x` directly.  We route it through an aliased identity Pallas
    kernel so there is a runnable hot path, without extra wrapper HBM passes.
    """
    if x.size == 0:
        return x
    orig_shape = x.shape
    orig_dtype = x.dtype

    view = _lane_dense_view(orig_shape, orig_dtype)
    if view is not None:
        rows, cols = view
        out2d = _tiled_identity_2d(x.reshape(rows, cols), alias=True)
        out = out2d.reshape(orig_shape)
    else:
        # Fallback for element counts with no 128-aligned factorization:
        # pad a flat view (costs one extra HBM pass; rarely hit).
        total = x.size
        lane = 512
        sublane = _sublane_multiple(orig_dtype)
        rows = pl.cdiv(total, lane)
        rows_p = ((rows + sublane - 1) // sublane) * sublane
        flat = jnp.pad(jnp.ravel(x), (0, rows_p * lane - total))
        out2d = _tiled_identity_2d(flat.reshape(rows_p, lane), alias=False)
        out = out2d.reshape(-1)[:total].reshape(orig_shape)

    assert out.dtype == orig_dtype, "identity kernel must not change dtype"
    return out


if __name__ == "__main__":
    key = jax.random.PRNGKey(0)
    # Small NCHW input consistent with a typical conv-net style module.
    x = jax.random.normal(key, (2, 4, 16, 16), dtype=jnp.float32)

    fwd = jax.jit(basic_module_forward)
    y = fwd(x)
    y = jax.block_until_ready(y)

    assert y.shape == x.shape
    assert y.dtype == x.dtype
    assert bool(jnp.allclose(y, x)), "identity kernel mismatch"

    print("KERNEL_OK")
</pallas_src>

<mosaic_0001>
module attributes {stable_mosaic.version = 11 : i64} {
  func.func @_identity_kernel(%arg0: memref<1x2048xf32, #tpu.memory_space<vmem>>, %arg1: memref<1x2048xf32, #tpu.memory_space<vmem>>) attributes {dimension_semantics = [], scalar_prefetch = 0 : i64, scratch_operands = 0 : i64, tpu.core_type = #tpu.core_type<tc>} {
    %c0 = arith.constant 0 : index
    %c0_0 = arith.constant 0 : index
    %0 = vector.load %arg0[%c0, %c0_0] : memref<1x2048xf32, #tpu.memory_space<vmem>>, vector<1x2048xf32>
    %c0_1 = arith.constant 0 : index
    %c0_2 = arith.constant 0 : index
    %1 = vector.load %arg1[%c0_1, %c0_2] : memref<1x2048xf32, #tpu.memory_space<vmem>>, vector<1x2048xf32>
    tpu.vector_store %arg1[%c0_1, %c0_2], %0 {strides = array<i32>} : memref<1x2048xf32, #tpu.memory_space<vmem>>, vector<1x2048xf32>,
    return
  }
}

</mosaic_0001>

<llo_original>
// kernel: basic_module_forward.1
$region0: #{basic_module_forward.1}
  #allocation0 [shape = 'u32[]', space=smem, size = 0x4, offset = 0x4, fixed_abs, tag = 'smem constant byte address 0x4 - core index']
  #allocation1 [shape = 'u32[144,128]{1,0:T(1,128)}', space=vmem, size = 0x12000, scoped, tag = 'internal scratch']
  %s0 = inlined_call_operand.vmem [shape: f32[1,2048], index: 0, kind: input, shape index: {}, may-alias: {0,1}]
  %s1 = inlined_call_operand.vmem [shape: f32[1,2048], index: 1, kind: output, shape index: {}, may-alias: {0,1}]
  %s2 = sld [smem:[#allocation0]]
  $region14: #{basic_module_forward.1} parent=0
    _
  %s4 = ssub.s32 1, %s2
  %s5 = scalar_select 0, %s4, %s2
  // Predicated region
  $region2: #{basic_module_forward.1} parent=0 // pred_check
    _
  $region3: #{basic_module_forward.1} parent=0 // pred_check_branch
    %7 = sbr.rel (0) target = $region5
  $region4: #{basic_module_forward.1} parent=0 // pred_region
    _
  $region5: #{basic_module_forward.1} parent=0 // pred_fallthru
    _
  %v8 = vld [vmem:[%s0] sm:$0xff]
  %v9 = vld [vmem:[%s0 + $0x8] sm:$0xff]
  %10 = vst [vmem:[%s1] sm:$0xff] %v8
  %11 = vst [vmem:[%s1 + $0x8] sm:$0xff] %v9
  // Predicated region
  $region6: #{basic_module_forward.1} parent=0 // pred_check
    _
  $region7: #{basic_module_forward.1} parent=0 // pred_check_branch
    %13 = sbr.rel (0) target = $region9
  $region8: #{basic_module_forward.1} parent=0 // pred_region
    _
  $region9: #{basic_module_forward.1} parent=0 // pred_fallthru
    _
  // Predicated region
  $region10: #{basic_module_forward.1} parent=0 // pred_check
    _
  $region11: #{basic_module_forward.1} parent=0 // pred_check_branch
    %15 = sbr.rel (0) target = $region13
  $region12: #{basic_module_forward.1} parent=0 // pred_region
    _
  $region13: #{basic_module_forward.1} parent=0 // pred_fallthru
    _

</llo_original>
